<compile_context>
chip_gen: v7x
topology: tpu7x:2x2x1
jax: 0.10.0
libtpu: 0.0.40
codegen_flags: <defaults>
</compile_context>

<pallas_src>
from functools import partial
import math

import jax
import jax.numpy as jnp
from jax.experimental import pallas as pl
from jax.experimental.pallas import tpu as pltpu


def _avg_grad_kernel(x_ref, o_ref, ax_ref, bx_ref, ay_ref, by_ref, *, H, W):
    """One (TR, L) block = (TR // H) stacked groups of (L // W) packed images."""
    i = pl.program_id(1)
    TR, L = x_ref.shape

    # ---- once per core: zero the accumulator and build the coefficient
    # planes.  Scratch persists across grid steps, so the steady-state body
    # below contains no iota, no integer mod, no compares, no selects.
    @pl.when(i == 0)
    def _init():
        o_ref[...] = jnp.zeros(o_ref.shape, o_ref.dtype)

        # Column (lane) planes: gx = ax*(right - x) + bx*(left - x)
        #   col == 0   : (1.0,  0.0)  ->  x[1]   - x[0]
        #   col == W-1 : (0.0, -1.0)  ->  x[W-1] - x[W-2]
        #   interior   : (0.5, -0.5)  -> (x[j+1] - x[j-1]) / 2
        col = jax.lax.broadcasted_iota(jnp.int32, (8, L), 1) % W
        axf = jnp.where(col == 0, 1.0,
                        jnp.where(col == W - 1, 0.0, 0.5)).astype(jnp.float32)
        bxf = jnp.where(col == 0, 0.0,
                        jnp.where(col == W - 1, -1.0, -0.5)).astype(jnp.float32)
        ax_ref[...] = axf[0:1, :]
        bx_ref[...] = bxf[0:1, :]

        # Row (sublane) planes: gy = ay*(down - x) + by*(up - x)
        row = jax.lax.broadcasted_iota(jnp.int32, (TR, 128), 0) % H
        ayf = jnp.where(row == 0, 1.0,
                        jnp.where(row == H - 1, 0.0, 0.5)).astype(jnp.float32)
        byf = jnp.where(row == 0, 0.0,
                        jnp.where(row == H - 1, -1.0, -0.5)).astype(jnp.float32)
        ay_ref[...] = ayf[:, 0:1]
        by_ref[...] = byf[:, 0:1]

    x = x_ref[...].astype(jnp.float32)          # (TR, L)

    # Neighbour shifts on the XLU (free slot relative to the saturated VALU).
    left = pltpu.roll(x, 1, axis=1)             # left[:, j]  = x[:, j-1] (wraps)
    right = pltpu.roll(x, L - 1, axis=1)        # right[:, j] = x[:, j+1] (wraps)
    up = pltpu.roll(x, 1, axis=0)               # up[r]   = x[r-1] (wraps)
    down = pltpu.roll(x, TR - 1, axis=0)        # down[r] = x[r+1] (wraps)

    # Pure-FP gradients; edge rows/cols multiply the wrapped neighbour by 0.
    gx = ax_ref[...] * (right - x) + bx_ref[...] * (left - x)
    gy = ay_ref[...] * (down - x) + by_ref[...] * (up - x)

    # sqrt(.../2): the 1/sqrt(2) is folded into the wrapper's final scale.
    val = jnp.sqrt(gx * gx + gy * gy)           # (TR, L)

    # VPU-only fold into the resident (1, 8, L) accumulator block.
    part = val.reshape(TR // 8, 8, L).sum(axis=0)       # (8, L)
    o_ref[...] = o_ref[...] + part[None]


def _choose_pack(nc, w, lane_cap=1024):
    """pack_w images side-by-side along lanes; maximize useful-lane fraction
    (dead-lane waste x zero-image-padding waste), tie-break on wider L."""
    if w >= 128:
        return 1
    p_max = max(1, min(lane_cap // w, nc))
    best_p, best_key = 1, (-1.0, -1)
    for p in range(1, p_max + 1):
        lanes = p * w
        density = lanes / (((lanes + 127) // 128) * 128)
        padded_nc = ((nc + p - 1) // p) * p
        eff = density * nc / padded_nc
        key = (round(eff, 6), lanes)
        if key > best_key:
            best_key, best_p = key, p
    return best_p


def _choose_k(G, H, L, itemsize, k0, P,
              target_bytes=6 << 20, tr_cap=4096, max_waste=0.15):
    """K = image-groups per block.  K is a multiple of k0 (8/16-aligned block
    rows), bounded by the block-byte budget, the row-scratch cap, and the
    zero-padding waste of rounding G up to a multiple of K*P."""
    per_group = H * L * itemsize
    m_max = max(1, min(target_bytes // (k0 * per_group), tr_cap // (k0 * H)))
    for m in range(int(m_max), 0, -1):
        K = k0 * m
        pad = (-G) % (K * P)
        if pad <= max_waste * (G + pad):
            return K
    return k0


def average_gradient_loss(img):
    """img: (N, C, H, W) array. Returns the scalar AverageGradientLoss (f32)."""
    N, C, H, W = img.shape
    if H < 2 or W < 2:
        raise ValueError("AverageGradientLoss needs H >= 2 and W >= 2.")

    if img.dtype != jnp.float32 and img.dtype != jnp.bfloat16:
        img = img.astype(jnp.float32)
    itemsize = img.dtype.itemsize
    sub_tile = 8 * (4 // itemsize)            # 8 rows for f32, 16 for bf16
    NC = N * C

    # ---- lane packing: pack_w whole images side by side along lanes ------
    pack_w = _choose_pack(NC, W)
    NC_pad = ((NC + pack_w - 1) // pack_w) * pack_w
    x = img.reshape(NC, H, W)
    if NC_pad > NC:                            # zero images contribute 0
        x = jnp.concatenate(
            [x, jnp.zeros((NC_pad - NC, H, W), x.dtype)], axis=0)
    G = NC_pad // pack_w                       # packed image-groups
    L = pack_w * W                             # lane width of the slab
    if pack_w > 1:
        x = (x.reshape(G, pack_w, H, W)
               .transpose(0, 2, 1, 3)
               .reshape(G * H, L))
    else:
        x = x.reshape(G * H, L)

    # ---- row tiling: K groups per block, 2-way core split on axis 0 ------
    k0 = sub_tile // math.gcd(H, sub_tile)     # K*H % sub_tile == 0
    P = 2                                      # both v7x TensorCores busy
    K = _choose_k(G, H, L, itemsize, k0, P)
    G_pad = ((G + K * P - 1) // (K * P)) * (K * P)
    if G_pad > G:                              # zero groups contribute 0
        x = jnp.concatenate(
            [x, jnp.zeros(((G_pad - G) * H, L), x.dtype)], axis=0)
    steps = G_pad // (K * P)
    TR = K * H                                 # rows per block (8/16-aligned)

    out = pl.pallas_call(
        partial(_avg_grad_kernel, H=H, W=W),
        out_shape=jax.ShapeDtypeStruct((P, 8, L), jnp.float32),
        grid_spec=pltpu.PrefetchScalarGridSpec(
            num_scalar_prefetch=0,
            grid=(P, steps),
            in_specs=[
                pl.BlockSpec((TR, L), lambda c, i: (c * steps + i, 0)),
            ],
            out_specs=pl.BlockSpec((1, 8, L), lambda c, i: (c, 0, 0)),
            scratch_shapes=[
                pltpu.VMEM((1, L), jnp.float32),    # ax
                pltpu.VMEM((1, L), jnp.float32),    # bx
                pltpu.VMEM((TR, 1), jnp.float32),   # ay
                pltpu.VMEM((TR, 1), jnp.float32),   # by
            ],
        ),
        compiler_params=pltpu.CompilerParams(
            dimension_semantics=("parallel", "arbitrary"),
            vmem_limit_bytes=32 * 1024 * 1024,
        ),
    )(x)

    # mean(sqrt((gx^2+gy^2)/2)) == sum(sqrt(gx^2+gy^2)) / (sqrt(2) * count),
    # with count = the TRUE element count (zero-padded images contribute 0).
    scale = 1.0 / (math.sqrt(2.0) * (N * C * H * W))
    return jnp.sum(out) * jnp.float32(scale)


def _reference(img):
    # Pure-JAX reference mirroring the PyTorch forward exactly.
    gx = jnp.zeros_like(img)
    gy = jnp.zeros_like(img)
    gx = gx.at[:, :, :, 0].set(img[:, :, :, 1] - img[:, :, :, 0])
    gx = gx.at[:, :, :, -1].set(img[:, :, :, -1] - img[:, :, :, -2])
    gx = gx.at[:, :, :, 1:-1].set((img[:, :, :, 2:] - img[:, :, :, :-2]) / 2)
    gy = gy.at[:, :, 0, :].set(img[:, :, 1, :] - img[:, :, 0, :])
    gy = gy.at[:, :, -1, :].set(img[:, :, -1, :] - img[:, :, -2, :])
    gy = gy.at[:, :, 1:-1, :].set((img[:, :, 2:, :] - img[:, :, :-2, :]) / 2)
    return jnp.mean(jnp.sqrt((gx ** 2 + gy ** 2) / 2))


if __name__ == "__main__":
    key = jax.random.PRNGKey(0)
    img = jax.random.normal(key, (2, 4, 16, 16), dtype=jnp.float32)

    loss = jax.block_until_ready(average_gradient_loss(img))
    ref = jax.block_until_ready(_reference(img))

    assert jnp.allclose(loss, ref, rtol=1e-5, atol=1e-5), (loss, ref)
    print("KERNEL_OK")
</pallas_src>

<mosaic_0001>
module attributes {stable_mosaic.version = 11 : i64} {
  func.func @_avg_grad_kernel(%arg0: i32, %arg1: i32, %arg2: memref<16x128xf32, #tpu.memory_space<vmem>>, %arg3: memref<1x8x128xf32, #tpu.memory_space<vmem>>, %arg4: memref<1x128xf32, #tpu.memory_space<vmem>>, %arg5: memref<1x128xf32, #tpu.memory_space<vmem>>, %arg6: memref<16x1xf32, #tpu.memory_space<vmem>>, %arg7: memref<16x1xf32, #tpu.memory_space<vmem>>) attributes {dimension_semantics = [#tpu.dimension_semantics<parallel>, #tpu.dimension_semantics<arbitrary>], iteration_bounds = array<i64: 2, 1>, scalar_prefetch = 0 : i64, scratch_operands = 4 : i64, tpu.core_type = #tpu.core_type<tc>, window_params = [{transform_indices = @transform_0, window_bounds = array<i64: 16, 128>}, {transform_indices = @transform_1, window_bounds = array<i64: 1, 8, 128>}]} {
    %c0_i32 = arith.constant 0 : i32
    %0 = arith.cmpi eq, %arg1, %c0_i32 : i32
    %1 = arith.extui %0 : i1 to i32
    %c0_i32_0 = arith.constant 0 : i32
    %2 = arith.cmpi ne, %1, %c0_i32_0 : i32
    scf.if %2 {
      %cst_17 = arith.constant 0.000000e+00 : f32
      %36 = vector.broadcast %cst_17 : f32 to vector<1x8x128xf32>
      %c0_18 = arith.constant 0 : index
      %c0_19 = arith.constant 0 : index
      %c0_20 = arith.constant 0 : index
      %37 = vector.load %arg3[%c0_18, %c0_19, %c0_20] : memref<1x8x128xf32, #tpu.memory_space<vmem>>, vector<1x8x128xf32>
      tpu.vector_store %arg3[%c0_18, %c0_19, %c0_20], %36 {strides = array<i32>} : memref<1x8x128xf32, #tpu.memory_space<vmem>>, vector<1x8x128xf32>,
      %38 = tpu.iota {dimensions = array<i32: 1>} : vector<8x128xi32>
      %c16_i32 = arith.constant 16 : i32
      %c0_i32_21 = arith.constant 0 : i32
      %39 = arith.cmpi eq, %c16_i32, %c0_i32_21 : i32
      %c1_i32_22 = arith.constant 1 : i32
      %40 = arith.select %39, %c1_i32_22, %c16_i32 : i32
      %41 = vector.broadcast %40 : i32 to vector<8x128xi32>
      %42 = arith.remsi %38, %41 : vector<8x128xi32>
      %c0_i32_23 = arith.constant 0 : i32
      %43 = vector.broadcast %c0_i32_23 : i32 to vector<8x128xi32>
      %44 = arith.cmpi ne, %42, %43 : vector<8x128xi32>
      %c0_i32_24 = arith.constant 0 : i32
      %45 = vector.broadcast %c0_i32_24 : i32 to vector<8x128xi32>
      %46 = arith.cmpi slt, %42, %45 : vector<8x128xi32>
      %c0_i32_25 = arith.constant 0 : i32
      %47 = arith.cmpi slt, %40, %c0_i32_25 : i32
      %48 = vector.broadcast %47 : i1 to vector<8x128xi1>
      %49 = vector.broadcast %48 : vector<8x128xi1> to vector<8x128xi1>
      %50 = arith.xori %46, %49 : vector<8x128xi1>
      %51 = arith.andi %50, %44 : vector<8x128xi1>
      %52 = vector.broadcast %40 : i32 to vector<8x128xi32>
      %53 = arith.addi %42, %52 : vector<8x128xi32>
      %54 = arith.select %51, %53, %42 : vector<8x128xi1>, vector<8x128xi32>
      %c0_i32_26 = arith.constant 0 : i32
      %55 = vector.broadcast %c0_i32_26 : i32 to vector<8x128xi32>
      %56 = arith.cmpi eq, %54, %55 : vector<8x128xi32>
      %c15_i32_27 = arith.constant 15 : i32
      %57 = vector.broadcast %c15_i32_27 : i32 to vector<8x128xi32>
      %58 = arith.cmpi eq, %54, %57 : vector<8x128xi32>
      %cst_28 = arith.constant 0.000000e+00 : f32
      %cst_29 = arith.constant 5.000000e-01 : f32
      %59 = vector.broadcast %cst_28 : f32 to vector<8x128xf32>
      %60 = vector.broadcast %cst_29 : f32 to vector<8x128xf32>
      %61 = arith.select %58, %59, %60 : vector<8x128xi1>, vector<8x128xf32>
      %cst_30 = arith.constant 1.000000e+00 : f32
      %62 = vector.broadcast %cst_30 : f32 to vector<8x128xf32>
      %63 = arith.select %56, %62, %61 : vector<8x128xi1>, vector<8x128xf32>
      %c0_i32_31 = arith.constant 0 : i32
      %64 = vector.broadcast %c0_i32_31 : i32 to vector<8x128xi32>
      %65 = arith.cmpi eq, %54, %64 : vector<8x128xi32>
      %c15_i32_32 = arith.constant 15 : i32
      %66 = vector.broadcast %c15_i32_32 : i32 to vector<8x128xi32>
      %67 = arith.cmpi eq, %54, %66 : vector<8x128xi32>
      %cst_33 = arith.constant -1.000000e+00 : f32
      %cst_34 = arith.constant -5.000000e-01 : f32
      %68 = vector.broadcast %cst_33 : f32 to vector<8x128xf32>
      %69 = vector.broadcast %cst_34 : f32 to vector<8x128xf32>
      %70 = arith.select %67, %68, %69 : vector<8x128xi1>, vector<8x128xf32>
      %cst_35 = arith.constant 0.000000e+00 : f32
      %71 = vector.broadcast %cst_35 : f32 to vector<8x128xf32>
      %72 = arith.select %65, %71, %70 : vector<8x128xi1>, vector<8x128xf32>
      %73 = vector.extract_strided_slice %63 {offsets = [0, 0], sizes = [1, 128], strides = [1, 1]} : vector<8x128xf32> to vector<1x128xf32>
      %c0_36 = arith.constant 0 : index
      %c0_37 = arith.constant 0 : index
      %74 = vector.load %arg4[%c0_36, %c0_37] : memref<1x128xf32, #tpu.memory_space<vmem>>, vector<1x128xf32>
      tpu.vector_store %arg4[%c0_36, %c0_37], %73 {strides = array<i32>} : memref<1x128xf32, #tpu.memory_space<vmem>>, vector<1x128xf32>,
      %75 = vector.extract_strided_slice %72 {offsets = [0, 0], sizes = [1, 128], strides = [1, 1]} : vector<8x128xf32> to vector<1x128xf32>
      %c0_38 = arith.constant 0 : index
      %c0_39 = arith.constant 0 : index
      %76 = vector.load %arg5[%c0_38, %c0_39] : memref<1x128xf32, #tpu.memory_space<vmem>>, vector<1x128xf32>
      tpu.vector_store %arg5[%c0_38, %c0_39], %75 {strides = array<i32>} : memref<1x128xf32, #tpu.memory_space<vmem>>, vector<1x128xf32>,
      %77 = tpu.iota {dimensions = array<i32: 0>} : vector<16x128xi32>
      %c16_i32_40 = arith.constant 16 : i32
      %c0_i32_41 = arith.constant 0 : i32
      %78 = arith.cmpi eq, %c16_i32_40, %c0_i32_41 : i32
      %c1_i32_42 = arith.constant 1 : i32
      %79 = arith.select %78, %c1_i32_42, %c16_i32_40 : i32
      %80 = vector.broadcast %79 : i32 to vector<16x128xi32>
      %81 = arith.remsi %77, %80 : vector<16x128xi32>
      %c0_i32_43 = arith.constant 0 : i32
      %82 = vector.broadcast %c0_i32_43 : i32 to vector<16x128xi32>
      %83 = arith.cmpi ne, %81, %82 : vector<16x128xi32>
      %c0_i32_44 = arith.constant 0 : i32
      %84 = vector.broadcast %c0_i32_44 : i32 to vector<16x128xi32>
      %85 = arith.cmpi slt, %81, %84 : vector<16x128xi32>
      %c0_i32_45 = arith.constant 0 : i32
      %86 = arith.cmpi slt, %79, %c0_i32_45 : i32
      %87 = vector.broadcast %86 : i1 to vector<16x128xi1>
      %88 = vector.broadcast %87 : vector<16x128xi1> to vector<16x128xi1>
      %89 = arith.xori %85, %88 : vector<16x128xi1>
      %90 = arith.andi %89, %83 : vector<16x128xi1>
      %91 = vector.broadcast %79 : i32 to vector<16x128xi32>
      %92 = arith.addi %81, %91 : vector<16x128xi32>
      %93 = arith.select %90, %92, %81 : vector<16x128xi1>, vector<16x128xi32>
      %c0_i32_46 = arith.constant 0 : i32
      %94 = vector.broadcast %c0_i32_46 : i32 to vector<16x128xi32>
      %95 = arith.cmpi eq, %93, %94 : vector<16x128xi32>
      %c15_i32_47 = arith.constant 15 : i32
      %96 = vector.broadcast %c15_i32_47 : i32 to vector<16x128xi32>
      %97 = arith.cmpi eq, %93, %96 : vector<16x128xi32>
      %cst_48 = arith.constant 0.000000e+00 : f32
      %cst_49 = arith.constant 5.000000e-01 : f32
      %98 = vector.broadcast %cst_48 : f32 to vector<16x128xf32>
      %99 = vector.broadcast %cst_49 : f32 to vector<16x128xf32>
      %100 = arith.select %97, %98, %99 : vector<16x128xi1>, vector<16x128xf32>
      %cst_50 = arith.constant 1.000000e+00 : f32
      %101 = vector.broadcast %cst_50 : f32 to vector<16x128xf32>
      %102 = arith.select %95, %101, %100 : vector<16x128xi1>, vector<16x128xf32>
      %c0_i32_51 = arith.constant 0 : i32
      %103 = vector.broadcast %c0_i32_51 : i32 to vector<16x128xi32>
      %104 = arith.cmpi eq, %93, %103 : vector<16x128xi32>
      %c15_i32_52 = arith.constant 15 : i32
      %105 = vector.broadcast %c15_i32_52 : i32 to vector<16x128xi32>
      %106 = arith.cmpi eq, %93, %105 : vector<16x128xi32>
      %cst_53 = arith.constant -1.000000e+00 : f32
      %cst_54 = arith.constant -5.000000e-01 : f32
      %107 = vector.broadcast %cst_53 : f32 to vector<16x128xf32>
      %108 = vector.broadcast %cst_54 : f32 to vector<16x128xf32>
      %109 = arith.select %106, %107, %108 : vector<16x128xi1>, vector<16x128xf32>
      %cst_55 = arith.constant 0.000000e+00 : f32
      %110 = vector.broadcast %cst_55 : f32 to vector<16x128xf32>
      %111 = arith.select %104, %110, %109 : vector<16x128xi1>, vector<16x128xf32>
      %112 = vector.extract_strided_slice %102 {offsets = [0, 0], sizes = [16, 1], strides = [1, 1]} : vector<16x128xf32> to vector<16x1xf32>
      %c0_56 = arith.constant 0 : index
      %c0_57 = arith.constant 0 : index
      %113 = vector.load %arg6[%c0_56, %c0_57] : memref<16x1xf32, #tpu.memory_space<vmem>>, vector<16x1xf32>
      tpu.vector_store %arg6[%c0_56, %c0_57], %112 {strides = array<i32>} : memref<16x1xf32, #tpu.memory_space<vmem>>, vector<16x1xf32>,
      %114 = vector.extract_strided_slice %111 {offsets = [0, 0], sizes = [16, 1], strides = [1, 1]} : vector<16x128xf32> to vector<16x1xf32>
      %c0_58 = arith.constant 0 : index
      %c0_59 = arith.constant 0 : index
      %115 = vector.load %arg7[%c0_58, %c0_59] : memref<16x1xf32, #tpu.memory_space<vmem>>, vector<16x1xf32>
      tpu.vector_store %arg7[%c0_58, %c0_59], %114 {strides = array<i32>} : memref<16x1xf32, #tpu.memory_space<vmem>>, vector<16x1xf32>,
    } else {
    }
    %c0 = arith.constant 0 : index
    %c0_1 = arith.constant 0 : index
    %3 = vector.load %arg2[%c0, %c0_1] : memref<16x128xf32, #tpu.memory_space<vmem>>, vector<16x128xf32>
    %c1_i32 = arith.constant 1 : i32
    %4 = tpu.dynamic_rotate %3 by %c1_i32 dim 1 : vector<16x128xf32>, i32 -> vector<16x128xf32>
    %c127_i32 = arith.constant 127 : i32
    %5 = tpu.dynamic_rotate %3 by %c127_i32 dim 1 : vector<16x128xf32>, i32 -> vector<16x128xf32>
    %c1_i32_2 = arith.constant 1 : i32
    %6 = tpu.dynamic_rotate %3 by %c1_i32_2 dim 0 : vector<16x128xf32>, i32 -> vector<16x128xf32>
    %c15_i32 = arith.constant 15 : i32
    %7 = tpu.dynamic_rotate %3 by %c15_i32 dim 0 : vector<16x128xf32>, i32 -> vector<16x128xf32>
    %c0_3 = arith.constant 0 : index
    %c0_4 = arith.constant 0 : index
    %8 = vector.load %arg4[%c0_3, %c0_4] : memref<1x128xf32, #tpu.memory_space<vmem>>, vector<1x128xf32>
    %9 = arith.subf %5, %3 : vector<16x128xf32>
    %10 = vector.broadcast %8 : vector<1x128xf32> to vector<16x128xf32>
    %11 = arith.mulf %10, %9 : vector<16x128xf32>
    %c0_5 = arith.constant 0 : index
    %c0_6 = arith.constant 0 : index
    %12 = vector.load %arg5[%c0_5, %c0_6] : memref<1x128xf32, #tpu.memory_space<vmem>>, vector<1x128xf32>
    %13 = arith.subf %4, %3 : vector<16x128xf32>
    %14 = vector.broadcast %12 : vector<1x128xf32> to vector<16x128xf32>
    %15 = arith.mulf %14, %13 : vector<16x128xf32>
    %16 = arith.addf %11, %15 : vector<16x128xf32>
    %c0_7 = arith.constant 0 : index
    %c0_8 = arith.constant 0 : index
    %17 = vector.load %arg6[%c0_7, %c0_8] : memref<16x1xf32, #tpu.memory_space<vmem>>, vector<16x1xf32>
    %18 = arith.subf %7, %3 : vector<16x128xf32>
    %19 = vector.broadcast %17 : vector<16x1xf32> to vector<16x128xf32>
    %20 = arith.mulf %19, %18 : vector<16x128xf32>
    %c0_9 = arith.constant 0 : index
    %c0_10 = arith.constant 0 : index
    %21 = vector.load %arg7[%c0_9, %c0_10] : memref<16x1xf32, #tpu.memory_space<vmem>>, vector<16x1xf32>
    %22 = arith.subf %6, %3 : vector<16x128xf32>
    %23 = vector.broadcast %21 : vector<16x1xf32> to vector<16x128xf32>
    %24 = arith.mulf %23, %22 : vector<16x128xf32>
    %25 = arith.addf %20, %24 : vector<16x128xf32>
    %26 = arith.mulf %16, %16 : vector<16x128xf32>
    %27 = arith.mulf %25, %25 : vector<16x128xf32>
    %28 = arith.addf %26, %27 : vector<16x128xf32>
    %29 = math.sqrt %28 : vector<16x128xf32>
    %30 = vector.shape_cast %29 : vector<16x128xf32> to vector<2x8x128xf32>
    %cst = arith.constant dense<0.000000e+00> : vector<8x128xf32>
    %31 = vector.multi_reduction <add>, %30, %cst [0] : vector<2x8x128xf32> to vector<8x128xf32>
    %c0_11 = arith.constant 0 : index
    %c0_12 = arith.constant 0 : index
    %c0_13 = arith.constant 0 : index
    %32 = vector.load %arg3[%c0_11, %c0_12, %c0_13] : memref<1x8x128xf32, #tpu.memory_space<vmem>>, vector<1x8x128xf32>
    %33 = vector.shape_cast %31 : vector<8x128xf32> to vector<1x8x128xf32>
    %34 = arith.addf %32, %33 : vector<1x8x128xf32>
    %c0_14 = arith.constant 0 : index
    %c0_15 = arith.constant 0 : index
    %c0_16 = arith.constant 0 : index
    %35 = vector.load %arg3[%c0_14, %c0_15, %c0_16] : memref<1x8x128xf32, #tpu.memory_space<vmem>>, vector<1x8x128xf32>
    tpu.vector_store %arg3[%c0_14, %c0_15, %c0_16], %34 {strides = array<i32>} : memref<1x8x128xf32, #tpu.memory_space<vmem>>, vector<1x8x128xf32>,
    return
  }
  func.func @transform_0(%arg0: i32, %arg1: i32) -> (i32, i32) {
    %c1_i32 = arith.constant 1 : i32
    %0 = arith.muli %arg0, %c1_i32 : i32
    %1 = arith.addi %0, %arg1 : i32
    %c0_i32 = arith.constant 0 : i32
    %c0_i32_0 = arith.constant 0 : i32
    return %1, %c0_i32 : i32, i32
  }
  func.func @transform_1(%arg0: i32, %arg1: i32) -> (i32, i32, i32) {
    %c0_i32 = arith.constant 0 : i32
    %c0_i32_0 = arith.constant 0 : i32
    %c0_i32_1 = arith.constant 0 : i32
    return %arg0, %c0_i32, %c0_i32_0 : i32, i32, i32
  }
}

</mosaic_0001>

<llo_original>
// kernel: tpu_custom_call.1
$region0: #{tpu_custom_call.1}
  #allocation0 [shape = 'u32[]', space=smem, size = 0x4, offset = 0x4, fixed_abs, tag = 'smem constant byte address 0x4 - core index']
  #allocation1 [shape = 'u32[144,128]{1,0:T(1,128)}', space=vmem, size = 0x12000, scoped, tag = 'internal scratch']
  #allocation2 [shape = 'f32[1,128]{1,0:T(1,128)}', space=vmem, size = 0x200, scoped, tag = 'scratch operand']
  #allocation3 [shape = 'f32[1,128]{1,0:T(1,128)}', space=vmem, size = 0x200, scoped, tag = 'scratch operand']
  #allocation4 [shape = 'f32[16,1]{1,0:T(8,128)}', space=vmem, size = 0x2000, scoped, tag = 'scratch operand']
  #allocation5 [shape = 'f32[16,1]{1,0:T(8,128)}', space=vmem, size = 0x2000, scoped, tag = 'scratch operand']
  %s0 = inlined_call_operand.hbm [shape: f32[32,128], index: 0, kind: input, shape index: {}]
  %s1 = inlined_call_operand.hbm [shape: f32[2,8,128], index: 1, kind: output, shape index: {}]
  %s2 = sld [smem:[#allocation0]]
  $region45: #{tpu_custom_call.1} parent=0
    _
  %s4 = ssub.s32 1, %s2
  %s5 = scalar_select 0, %s4, %s2
  $region1: #{tpu_custom_call.1} parent=0
    #allocation6 [shape = 'u8[16384]{0}', space=vmem, size = 0x4000, scoped, tag = 'input window, operand 0']
    #allocation7 [shape = 's32[2]{0}', space=sflag, size = 0x8, scoped, tag = 'scoped memory for tpu_custom_call.1']
    #allocation8 [shape = 's32[2]{0}', space=sflag, size = 0x8, scoped, tag = 'scoped memory for tpu_custom_call.1']
    #allocation9 [shape = 'u8[8192]{0}', space=vmem, size = 0x2000, scoped, tag = 'output window, operand 0']
    %6 = vsyncpa [#allocation7], 0
    %s7 = scalar_lea.sflag [#allocation7], 1
    %8 = vsyncpa %s7, 0
    %9 = vsyncpa [#allocation8], 0
    %s10 = scalar_lea.sflag [#allocation8], 1
    %11 = vsyncpa %s10, 0
    loop: start=0, step=1, limit=4
    $region2: #{tpu_custom_call.1} parent=1 // loop_pre_header
      _
    $region3: #{tpu_custom_call.1} parent=1 // loop_header
      %s13 = sphi 0, %s17
      %p14 = scmp.ge.s32.totalorder %s13, 4
      %s20 = sphi 0, %s32
      %s21 = sphi 0, %s28
      %s22 = sphi 0, %s20
      %s23 = sphi 0, %s21
      %s24 = sphi 0, %s22
      %s25 = sphi 0, %s23
      %s37 = sphi 0, %s39
      %s40 = sphi 0, %s37
      %s41 = sphi 0, %s40
      %s57 = sphi 0, %s41
      %s63 = sphi 0, %s65
      %s66 = sphi 0, %s63
      %s67 = sphi 0, %s66
      %s83 = sphi 0, %s67
    $region4: #{tpu_custom_call.1} parent=1 // loop_header_branch
      %16 = sbr.rel (%p14) target = $region8
    $region5: #{tpu_custom_call.1} parent=1 // loop_body
      %s18 = ssub.s32 %s13, 1
      %s19 = ssub.s32 %s13, 2
      %s26 = sadd.s32 1, %s21
      %p27 = scmp.ge.s32.totalorder %s26, 1
      %s28 = scalar_select %p27, 0, %s26
      %s29 = sadd.s32 1, %s20
      %s30 = scalar_select %p27, %s29, %s20
      %p31 = scmp.ge.s32.totalorder %s30, 2
      %s32 = scalar_select %p31, 0, %s30
      %s33 = sadd.s32 %s20, %s21
      %s34 = sadd.s32 %s32, %s28
      %s35 = ssub.s32 %s33, %s34
      %p36 = scmp.eq.s32.totalorder %s35, 0
      %s38 = sadd.s32 %s37, 1
      %s39 = scalar_select %p36, %s37, %s38
      %p42 = pneg %p36
      %p43 = scmp.eq.s32.totalorder %s13, 1
      %p44 = por %p42, %p43
      %p45 = scmp.ne.s32.totalorder %s37, %s40
      %p46 = scmp.eq.s32.totalorder %s13, 0
      %p47 = por %p45, %p46
      %p48 = scmp.ne.s32.totalorder %s37, %s40
      %p49 = scmp.eq.s32.totalorder %s18, 1
      %p50 = por %p48, %p49
      %p51 = scmp.ne.s32.totalorder %s40, %s41
      %p52 = scmp.eq.s32.totalorder %s18, 0
      %p53 = por %p51, %p52
      %p54 = scmp.ne.s32.totalorder %s40, %s41
      %p55 = scmp.eq.s32.totalorder %s19, 1
      %p56 = por %p54, %p55
      %p58 = scmp.ne.s32.totalorder %s41, %s57
      %p59 = scmp.eq.s32.totalorder %s19, 0
      %p60 = por %p58, %p59
      %s61 = ssub.s32 %s20, %s32
      %p62 = scmp.eq.s32.totalorder %s61, 0
      %s64 = sadd.s32 %s63, 1
      %s65 = scalar_select %p62, %s63, %s64
      %p68 = pneg %p62
      %p69 = scmp.eq.s32.totalorder %s13, 1
      %p70 = por %p68, %p69
      %p71 = scmp.ne.s32.totalorder %s63, %s66
      %p72 = scmp.eq.s32.totalorder %s13, 0
      %p73 = por %p71, %p72
      %p74 = scmp.ne.s32.totalorder %s63, %s66
      %p75 = scmp.eq.s32.totalorder %s18, 1
      %p76 = por %p74, %p75
      %p77 = scmp.ne.s32.totalorder %s66, %s67
      %p78 = scmp.eq.s32.totalorder %s18, 0
      %p79 = por %p77, %p78
      %p80 = scmp.ne.s32.totalorder %s66, %s67
      %p81 = scmp.eq.s32.totalorder %s19, 1
      %p82 = por %p80, %p81
      %p84 = scmp.ne.s32.totalorder %s67, %s83
      %p85 = scmp.eq.s32.totalorder %s19, 0
      %p86 = por %p84, %p85
      %p87 = scmp.le.s32.totalorder 1, %s13
      %p88 = scmp.lt.s32.totalorder %s13, 3
      %p89 = pnand %p87, %p88
      %p90 = pneg %p89
      // Predicated region
      $region9: #{tpu_custom_call.1} parent=5 // pred_check
        _
      $region10: #{tpu_custom_call.1} parent=5 // pred_check_branch
        %92 = sbr.rel (%p89) target = $region12
      $region11: #{tpu_custom_call.1} parent=5 // pred_region
        %s93 = ssub.s32 %s13, 1
      $region12: #{tpu_custom_call.1} parent=5 // pred_fallthru
        _
      %p94 = scmp.lt.s32.totalorder %s13, 2
      // Predicated region
      $region13: #{tpu_custom_call.1} parent=5 // pred_check
        %p95 = pneg %p94
      $region14: #{tpu_custom_call.1} parent=5 // pred_check_branch
        %97 = sbr.rel (%p95) target = $region16
      $region15: #{tpu_custom_call.1} parent=5 // pred_region
        // Predicated region
        $region17: #{tpu_custom_call.1} parent=15 // pred_check
          %p98 = pneg %p47
        $region18: #{tpu_custom_call.1} parent=15 // pred_check_branch
          %100 = sbr.rel (%p98) target = $region20
        $region19: #{tpu_custom_call.1} parent=15 // pred_region
          %s101 = sand.u32 %s37, 1
          %s102 = scalar_lea.sflag [#allocation7], %s101
          %s103 = sand.u32 %s37, 1
          %s104 = smul.addr %s103, 16
          %s105 = scalar_lea.vmem [#allocation6], %s104
          %s106 = sadd.s32 %s20, %s21
          %s107 = smul.u32 2, %s106
          %s109 = ssub.s32 256, 256
          %110 = vsyncadd %s102, %s109
          %s111 = smul.addr %s107, 128
          %s112 = scalar_lea.hbm %s0, %s111
          %s113 = sshll.u32 %s105, 4
          %s114 = int_to_ptr.vmem [resolvable:$true] %s113
          %119 = dma.hbm_to_vmem [thread:$0]  %s112, 256, %s114, %s102, 128, 128, 8
        $region20: #{tpu_custom_call.1} parent=15 // pred_fallthru
          _
      $region16: #{tpu_custom_call.1} parent=5 // pred_fallthru
        _
      %p120 = scmp.le.s32.totalorder 1, %s13
      %p121 = scmp.lt.s32.totalorder %s13, 3
      %p122 = pnand %p120, %p121
      %p123 = pneg %p122
      // Predicated region
      $region21: #{tpu_custom_call.1} parent=5 // pred_check
        _
      $region22: #{tpu_custom_call.1} parent=5 // pred_check_branch
        %125 = sbr.rel (%p122) target = $region24
      $region23: #{tpu_custom_call.1} parent=5 // pred_region
        %s126 = ssub.s32 %s13, 1
        %s127 = sand.u32 %s40, 1
        %s128 = scalar_lea.sflag [#allocation7], %s127
        %s129 = sand.u32 %s40, 1
        %s130 = smul.addr %s129, 16
        %s131 = scalar_lea.vmem [#allocation6], %s130
        // Predicated region
        $region25: #{tpu_custom_call.1} parent=23 // pred_check
          %p132 = pneg %p53
        $region26: #{tpu_custom_call.1} parent=23 // pred_check_branch
          %134 = sbr.rel (%p132) target = $region28
        $region27: #{tpu_custom_call.1} parent=23 // pred_region
          %135 = dma.done %s128, 256
        $region28: #{tpu_custom_call.1} parent=23 // pred_fallthru
          _
        %s136 = sand.u32 %s40, 1
        %s137 = scalar_lea.sflag [#allocation7], %s136
        %s138 = sand.u32 %s40, 1
        %s139 = smul.addr %s138, 16
        %s140 = scalar_lea.vmem [#allocation6], %s139
        %p141 = pneg %p53
        %p142 = pneg %p50
        %p143 = pneg %p79
        %p144 = pneg %p76
        %s145 = sand.u32 %s66, 1
        %s146 = scalar_lea.sflag [#allocation8], %s145
        %s147 = sand.u32 %s66, 1
        %s148 = smul.addr %s147, 8
        %s149 = scalar_lea.vmem [#allocation9], %s148
        %s150 = sadd.s32 %s22, %s23
        %s151 = smul.u32 2, %s150
        %p152 = scmp.eq.s32.totalorder %s23, 0
        // Predicated region
        $region29: #{tpu_custom_call.1} parent=23 // pred_check
          %p153 = pneg %p152
        $region30: #{tpu_custom_call.1} parent=23 // pred_check_branch
          %155 = sbr.rel (%p153) target = $region32
        $region31: #{tpu_custom_call.1} parent=23 // pred_region
          %156 = vst [vmem:[%s149] sm:$0xff] 0.0
          %v157 = vlaneseq
          %v158 = vand.u32 %v157, 127
          %vm159 = vcmp.lt.s32.totalorder %v158, 0
          %v160 = vsub.s32 0, %v158
          %v161 = vsel %vm159, %v160, %v158
          %v162 = vshrl.u32 %v161, 4
          %v163 = vand.u32 %v161, 15
          %v164 = vsub.s32 0, %v163
          %v165 = vsel %vm159, %v164, %v163
          %vm166 = vcmp.ne.s32.totalorder %v165, 0
          %vm167 = vcmp.lt.s32.totalorder %v165, 0
          %vm168 = vmand %vm167, %vm166
          %v169 = vadd.s32 %v165, 16
          %v170 = vsel %vm168, %v169, %v165
          %vm171 = vcmp.eq.s32.totalorder %v170, 0
          %vm172 = vcmp.eq.s32.totalorder %v170, 15
          %v173 = vsel %vm172, 0.0, 0.5
          %v174 = vsel %vm171, 1.0, %v173
          %v175 = vsel %vm172, -1.0, -0.5
          %v176 = vsel %vm171, 0.0, %v175
          %177 = vst [vmem:[#allocation2] sm:$0x1] %v174
          %178 = vst [vmem:[#allocation3] sm:$0x1] %v176
          %v179 = vlaneseq
          %v180 = vshrl.u32 %v179, 7
          %v181 = vadd.s32 %v180, 8
          %vm182 = vcmp.lt.s32.totalorder %v180, 0
          %v183 = vsub.s32 0, %v180
          %v184 = vsel %vm182, %v183, %v180
          %v185 = vshrl.u32 %v184, 4
          %v186 = vand.u32 %v184, 15
          %v187 = vsub.s32 0, %v186
          %v188 = vsel %vm182, %v187, %v186
          %vm189 = vcmp.lt.s32.totalorder %v181, 0
          %v190 = vsub.s32 0, %v181
          %v191 = vsel %vm189, %v190, %v181
          %v192 = vshrl.u32 %v191, 4
          %v193 = vand.u32 %v191, 15
          %v194 = vsub.s32 0, %v193
          %v195 = vsel %vm189, %v194, %v193
          %vm196 = vcmp.ne.s32.totalorder %v188, 0
          %vm197 = vcmp.ne.s32.totalorder %v195, 0
          %vm198 = vcmp.lt.s32.totalorder %v188, 0
          %vm199 = vcmp.lt.s32.totalorder %v195, 0
          %vm200 = vmand %vm198, %vm196
          %vm201 = vmand %vm199, %vm197
          %v202 = vadd.s32 %v188, 16
          %v203 = vadd.s32 %v195, 16
          %v204 = vsel %vm200, %v202, %v188
          %v205 = vsel %vm201, %v203, %v195
          %vm206 = vcmp.eq.s32.totalorder %v204, 0
          %vm207 = vcmp.eq.s32.totalorder %v205, 0
          %vm208 = vcmp.eq.s32.totalorder %v204, 15
          %vm209 = vcmp.eq.s32.totalorder %v205, 15
          %v210 = vsel %vm208, 0.0, 0.5
          %v211 = vsel %vm209, 0.0, 0.5
          %v212 = vsel %vm206, 1.0, %v210
          %v213 = vsel %vm207, 1.0, %v211
          %v214 = vsel %vm208, -1.0, -0.5
          %v215 = vsel %vm209, -1.0, -0.5
          %v216 = vsel %vm206, 0.0, %v214
          %v217 = vsel %vm207, 0.0, %v215
          %vm218 = vcmask 7168
          %219 = vst.msk [vmem:[#allocation4] sm:$0xff] %vm218, %v212
          %220 = vst.msk [vmem:[#allocation4 + $0x8] sm:$0xff] %vm218, %v213
          %221 = vst.msk [vmem:[#allocation5] sm:$0xff] %vm218, %v216
          %222 = vst.msk [vmem:[#allocation5 + $0x8] sm:$0xff] %vm218, %v217
        $region32: #{tpu_custom_call.1} parent=23 // pred_fallthru
          _
        %v223 = vld [vmem:[%s131] sm:$0xff]
        %v224 = vld [vmem:[%s131 + $0x8] sm:$0xff]
        %225 = vrot.lane.b32.xlu0 %v223, 1
        %v226 = vpop.permute.xlu0 %225
        %227 = vrot.lane.b32.xlu0 %v224, 1
        %v228 = vpop.permute.xlu0 %227
        %229 = vrot.lane.b32.xlu0 %v223, 127
        %v230 = vpop.permute.xlu0 %229
        %231 = vrot.lane.b32.xlu0 %v224, 127
        %v232 = vpop.permute.xlu0 %231
        %v233 = vrot.slane %v223, 7
        %v234 = vrot.slane %v224, 7
        %v235 = vlaneseq
        %v236 = vshrl.u32 %v235, 7
        %vm237 = vcmp.lt.s32.totalorder %v236, 1
        %v238 = vsel %vm237, %v233, %v234
        %v239 = vsel %vm237, %v234, %v233
        %v240 = vrot.slane %v223, 1
        %v241 = vrot.slane %v224, 1
        %vm242 = vcmp.lt.s32.totalorder %v236, 7
        %v243 = vsel %vm242, %v240, %v241
        %v244 = vsel %vm242, %v241, %v240
        %v245 = vld [vmem:[#allocation2] sm:$0x1]
        %v246 = vsub.f32 %v230, %v223
        %v247 = vsub.f32 %v232, %v224
        %v249 = vlaneseq
        %v250 = vshrl.u32 %v249, 7
        %v251 = vsub.s32 0, %v250
        %v252 = vrot.slane %v245, %v251
        %v254 = vmul.f32 %v252, %v246
        %v255 = vmul.f32 %v252, %v247
        %v256 = vld [vmem:[#allocation3] sm:$0x1]
        %v257 = vsub.f32 %v226, %v223
        %v258 = vsub.f32 %v228, %v224
        %v260 = vlaneseq
        %v261 = vshrl.u32 %v260, 7
        %v262 = vsub.s32 0, %v261
        %v263 = vrot.slane %v256, %v262
        %v265 = vmul.f32 %v263, %v257
        %v266 = vmul.f32 %v263, %v258
        %v267 = vadd.f32 %v254, %v265
        %v268 = vadd.f32 %v255, %v266
        %v269 = vld [vmem:[#allocation4] sm:$0xff]
        %v270 = vld [vmem:[#allocation4 + $0x8] sm:$0xff]
        %v271 = vsub.f32 %v243, %v223
        %v272 = vsub.f32 %v244, %v224
        %274 = vset.pattern.permute.xlu0 0
        %275 = vperm.xlu0 %274, %v269
        %v276 = vpop.permute.xlu0 %275
        %279 = vset.pattern.permute.xlu0 0
        %280 = vperm.xlu0 %279, %v270
        %v281 = vpop.permute.xlu0 %280
        %v283 = vmul.f32 %v276, %v271
        %v284 = vmul.f32 %v281, %v272
        %v285 = vld [vmem:[#allocation5] sm:$0xff]
        %v286 = vld [vmem:[#allocation5 + $0x8] sm:$0xff]
        %v287 = vsub.f32 %v239, %v223
        %v288 = vsub.f32 %v238, %v224
        %290 = vset.pattern.permute.xlu0 0
        %291 = vperm.xlu0 %290, %v285
        %v292 = vpop.permute.xlu0 %291
        %295 = vset.pattern.permute.xlu0 0
        %296 = vperm.xlu0 %295, %v286
        %v297 = vpop.permute.xlu0 %296
        %v299 = vmul.f32 %v292, %v287
        %v300 = vmul.f32 %v297, %v288
        %v301 = vadd.f32 %v283, %v299
        %v302 = vadd.f32 %v284, %v300
        %v303 = vmul.f32 %v267, %v267
        %v304 = vmul.f32 %v268, %v268
        %v305 = vmul.f32 %v301, %v301
        %v306 = vmul.f32 %v302, %v302
        %v307 = vadd.f32 %v303, %v305
        %v308 = vadd.f32 %v304, %v306
        %v309 = vrsqrt.pop %v307
        %v310 = vmul.f32 %v307, %v309
        %vm311 = vcmp.eq.f32.partialorder %v307, inf
        %v312 = vsel %vm311, %v307, %v310
        %vm313 = vcmp.eq.f32.partialorder %v307, 0.0
        %v314 = vand.u32 %v307, 2147483648
        %v315 = vsel %vm313, %v314, %v312
        %v316 = vrsqrt.pop %v308
        %v317 = vmul.f32 %v308, %v316
        %vm318 = vcmp.eq.f32.partialorder %v308, inf
        %v319 = vsel %vm318, %v308, %v317
        %vm320 = vcmp.eq.f32.partialorder %v308, 0.0
        %v321 = vand.u32 %v308, 2147483648
        %v322 = vsel %vm320, %v321, %v319
        %v323 = vadd.f32 %v315, %v322
        %v324 = vld [vmem:[%s149] sm:$0xff]
        %v325 = vadd.f32 %v324, %v323
        %326 = vst [vmem:[%s149] sm:$0xff] %v325
        %s327 = sand.u32 %s66, 1
        %s328 = scalar_lea.sflag [#allocation8], %s327
        %s329 = sand.u32 %s66, 1
        %s330 = smul.addr %s329, 8
        %s331 = scalar_lea.vmem [#allocation9], %s330
        // Predicated region
        $region33: #{tpu_custom_call.1} parent=23 // pred_check
          %p332 = pneg %p76
        $region34: #{tpu_custom_call.1} parent=23 // pred_check_branch
          %334 = sbr.rel (%p332) target = $region36
        $region35: #{tpu_custom_call.1} parent=23 // pred_region
          %s336 = ssub.s32 128, 128
          %337 = vsyncadd %s328, %s336
          %s338 = smul.addr %s22, 128
          %s339 = scalar_lea.hbm %s1, %s338
          %s341 = sshll.u32 %s331, 4
          %s342 = int_to_ptr.vmem [resolvable:$true] %s341
          %344 = dma.vmem_to_hbm [thread:$0]  %s342, 128, %s339, %s328
        $region36: #{tpu_custom_call.1} parent=23 // pred_fallthru
          _
      $region24: #{tpu_custom_call.1} parent=5 // pred_fallthru
        _
      %p345 = scmp.le.s32.totalorder 2, %s13
      // Predicated region
      $region37: #{tpu_custom_call.1} parent=5 // pred_check
        %p346 = pneg %p345
      $region38: #{tpu_custom_call.1} parent=5 // pred_check_branch
        %348 = sbr.rel (%p346) target = $region40
      $region39: #{tpu_custom_call.1} parent=5 // pred_region
        %s349 = ssub.s32 %s13, 2
        // Predicated region
        $region41: #{tpu_custom_call.1} parent=39 // pred_check
          %p350 = pneg %p82
        $region42: #{tpu_custom_call.1} parent=39 // pred_check_branch
          %352 = sbr.rel (%p350) target = $region44
        $region43: #{tpu_custom_call.1} parent=39 // pred_region
          %s353 = sand.u32 %s67, 1
          %s354 = scalar_lea.sflag [#allocation8], %s353
          %s355 = sand.u32 %s67, 1
          %s356 = smul.addr %s355, 8
          %s357 = scalar_lea.vmem [#allocation9], %s356
          %358 = dma.done %s354, 128
        $region44: #{tpu_custom_call.1} parent=39 // pred_fallthru
          _
      $region40: #{tpu_custom_call.1} parent=5 // pred_fallthru
        _
    $region6: #{tpu_custom_call.1} parent=1 // loop_footer
      %s17 = sadd.s32 1, %s13
    $region7: #{tpu_custom_call.1} parent=1 // loop_footer_branch
      %12 = sbr.rel target = $region3
    $region8: #{tpu_custom_call.1} parent=1 // loop_exit
      _
    %359 = vsyncpa [#allocation7], 1
    %s360 = scalar_lea.sflag [#allocation7], 1
    %361 = vsyncpa %s360, 1
    %362 = vsyncpa [#allocation8], 1
    %s363 = scalar_lea.sflag [#allocation8], 1
    %364 = vsyncpa %s363, 1

</llo_original>
